<compile_context>
chip_gen: v5e
topology: v5e:2x2
jax: 0.10.0
libtpu: 0.0.40
codegen_flags: <defaults>
</compile_context>

<pallas_src>
import functools

import jax
import jax.numpy as jnp
from jax import lax
from jax.experimental import pallas as pl
from jax.experimental.pallas import tpu as pltpu

LANE = 128  # TPU lane width; each Q/K/V group occupies one full 128-lane slab.


def _head_kernel(x_ref, w_ref, o_ref, *, B: int, T: int):
    # x_ref: (B*T, C)        bf16
    # w_ref: (C, 3*LANE)     bf16   (scale pre-folded into q columns)
    # o_ref: (B*T, LANE)     f32    (lane-dense; valid head in columns [0, H))
    N = x_ref.shape[0]  # B*T

    x = x_ref[...]
    w = w_ref[...]

    # Fused QKV projection: one bf16 MXU matmul, f32 accumulation.
    qkv = jnp.dot(x, w, preferred_element_type=jnp.float32)      # (N, 3*LANE)

    # 128-lane-aligned split -> free full-vreg views (padding lanes are zero).
    q = qkv[:, 0 * LANE:1 * LANE].astype(jnp.bfloat16)            # (N, LANE)
    k = qkv[:, 1 * LANE:2 * LANE].astype(jnp.bfloat16)            # (N, LANE)
    v = qkv[:, 2 * LANE:3 * LANE].astype(jnp.bfloat16)            # (N, LANE)

    # Attention scores: batch collapsed into a single (N, N) MXU push.
    # Contract the last dims directly (no explicit transpose); the zero
    # padding lanes contribute nothing to the contraction.
    wei = lax.dot_general(q, k, (((1,), (1,)), ((), ())),
                          preferred_element_type=jnp.float32)     # (N, N) f32

    # Combined causal + same-batch mask from 2-D iotas (diagonal always kept,
    # so no fully-masked rows / NaNs).  Batch id is derived without vector
    # integer division: shift when T is a power of two, else a short chain of
    # comparisons (B is small and static).
    r = lax.broadcasted_iota(jnp.int32, (N, N), 0)
    c = lax.broadcasted_iota(jnp.int32, (N, N), 1)
    if (T & (T - 1)) == 0:
        sh = T.bit_length() - 1
        rb = r >> sh
        cb = c >> sh
    else:
        rb = jnp.zeros((N, N), jnp.int32)
        cb = jnp.zeros((N, N), jnp.int32)
        for b in range(1, B):
            rb = rb + (r >= b * T).astype(jnp.int32)
            cb = cb + (c >= b * T).astype(jnp.int32)
    keep = (rb == cb) & (c <= r)
    wei = jnp.where(keep, wei, -jnp.inf)

    # Numerically stable softmax in f32; denominator via EUP approx reciprocal.
    wei = wei - jnp.max(wei, axis=-1, keepdims=True)
    p = jnp.exp(wei)
    p = p * pl.reciprocal(jnp.sum(p, axis=-1, keepdims=True), approx=True)

    # Weighted sum of values: one (N, N) @ (N, LANE) push, f32 accumulation.
    out = jnp.dot(p.astype(jnp.bfloat16), v,
                  preferred_element_type=jnp.float32)              # (N, LANE)
    o_ref[...] = out.astype(o_ref.dtype)    # unmasked, lane-dense store


def pack_head_params(wq, wk, wv):
    """Pack the static projection weights ONCE (outside the per-call path).

    Returns a (C, 3*128) bf16 matrix with q in lanes [0, H) (pre-scaled by
    C**-0.5), k in lanes [128, 128+H), v in lanes [256, 256+H); remaining
    lanes are zero so they are inert in every downstream matmul.
    """
    C, H = wq.shape
    assert H <= LANE, "head_size must fit in one 128-lane group"
    scale = float(C) ** -0.5
    w = jnp.zeros((C, 3 * LANE), dtype=jnp.float32)
    w = w.at[:, 0:H].set(wq * scale)
    w = w.at[:, LANE:LANE + H].set(wk)
    w = w.at[:, 2 * LANE:2 * LANE + H].set(wv)
    return w.astype(jnp.bfloat16)


@functools.partial(jax.jit, static_argnames=("head_size",))
def head_forward(x, wqkv_packed, head_size):
    """Single-head causal self-attention.

    x:            (B, T, C) float32
    wqkv_packed:  (C, 3*128) bfloat16 from pack_head_params()
    returns       (B, T, head_size) float32
    """
    B, T, C = x.shape
    N = B * T
    x2d = x.reshape(N, C).astype(jnp.bfloat16)   # half the activation DMA

    cost = pl.CostEstimate(
        flops=2 * N * C * 3 * LANE + 2 * N * N * LANE + 2 * N * N * LANE,
        transcendentals=N * N,
        bytes_accessed=x2d.size * 2 + wqkv_packed.size * 2 + N * LANE * 4,
    )

    out_pad = pl.pallas_call(
        functools.partial(_head_kernel, B=B, T=T),
        out_shape=jax.ShapeDtypeStruct((N, LANE), jnp.float32),
        in_specs=[
            pl.BlockSpec(memory_space=pltpu.MemorySpace.VMEM),   # x2d (whole)
            pl.BlockSpec(memory_space=pltpu.MemorySpace.VMEM),   # wqkv (whole)
        ],
        out_specs=pl.BlockSpec(memory_space=pltpu.MemorySpace.VMEM),
        cost_estimate=cost,
    )(x2d, wqkv_packed)

    # Lane-dense slab -> module output shape (cheap wrapper-side slice).
    return out_pad[:, :head_size].reshape(B, T, head_size).astype(x.dtype)


def _reference(x, wq, wk, wv):
    """Pure-JAX (f32) reference mirroring the PyTorch forward."""
    B, T, C = x.shape
    q = x @ wq
    k = x @ wk
    v = x @ wv
    wei = (q @ jnp.swapaxes(k, -2, -1)) * (C ** -0.5)
    mask = jnp.tril(jnp.ones((T, T), dtype=bool))
    wei = jnp.where(mask, wei, -jnp.inf)
    wei = jax.nn.softmax(wei, axis=-1)
    return wei @ v


if __name__ == "__main__":
    # Module hyper-params (small, consistent with the forward pass).
    n_embed = 32      # C
    head_size = 16    # H
    block_size = 8    # max sequence length; T == block_size here
    B, T = 2, block_size

    key = jax.random.PRNGKey(0)
    kx, kq, kk, kv = jax.random.split(key, 4)

    x = jax.random.normal(kx, (B, T, n_embed), dtype=jnp.float32)
    # Deterministic "Linear(bias=False)" weights, stored pre-transposed (C, H).
    wq = jax.random.normal(kq, (n_embed, head_size), dtype=jnp.float32) * 0.1
    wk = jax.random.normal(kk, (n_embed, head_size), dtype=jnp.float32) * 0.1
    wv = jax.random.normal(kv, (n_embed, head_size), dtype=jnp.float32) * 0.1

    # Static pre-pack: done once, outside the jitted per-call path.
    wqkv = pack_head_params(wq, wk, wv)

    out = jax.block_until_ready(head_forward(x, wqkv, head_size))
    ref = _reference(x, wq, wk, wv)

    assert out.shape == (B, T, head_size)
    # bf16 MXU operands + approx reciprocal -> loosened tolerance vs f32 ref.
    assert jnp.allclose(out, ref, atol=3e-2, rtol=3e-2), "mismatch vs reference"

    print("KERNEL_OK")
</pallas_src>

<mosaic_0001>
module attributes {stable_mosaic.version = 11 : i64} {
  func.func @_head_kernel(%arg0: memref<16x32xbf16, #tpu.memory_space<vmem>>, %arg1: memref<32x384xbf16, #tpu.memory_space<vmem>>, %arg2: memref<16x128xf32, #tpu.memory_space<vmem>>) attributes {dimension_semantics = [], scalar_prefetch = 0 : i64, scratch_operands = 0 : i64, tpu.core_type = #tpu.core_type<tc>} {
    %c0 = arith.constant 0 : index
    %c0_0 = arith.constant 0 : index
    %0 = vector.load %arg0[%c0, %c0_0] : memref<16x32xbf16, #tpu.memory_space<vmem>>, vector<16x32xbf16>
    %c0_1 = arith.constant 0 : index
    %c0_2 = arith.constant 0 : index
    %1 = vector.load %arg1[%c0_1, %c0_2] : memref<32x384xbf16, #tpu.memory_space<vmem>>, vector<32x384xbf16>
    %cst = arith.constant dense<0.000000e+00> : vector<16x384xf32>
    %2 = tpu.matmul %0, %1, %cst {dimension_numbers = #tpu.dot_dimension_numbers<[1], [0], [0], [1], [0, 0, 1, 1], [], []>} : vector<16x32xbf16>, vector<32x384xbf16>, vector<16x384xf32> -> vector<16x384xf32>
    %3 = vector.extract_strided_slice %2 {offsets = [0, 0], sizes = [16, 128], strides = [1, 1]} : vector<16x384xf32> to vector<16x128xf32>
    %4 = arith.truncf %3 : vector<16x128xf32> to vector<16x128xbf16>
    %5 = vector.extract_strided_slice %2 {offsets = [0, 128], sizes = [16, 128], strides = [1, 1]} : vector<16x384xf32> to vector<16x128xf32>
    %6 = arith.truncf %5 : vector<16x128xf32> to vector<16x128xbf16>
    %7 = vector.extract_strided_slice %2 {offsets = [0, 256], sizes = [16, 128], strides = [1, 1]} : vector<16x384xf32> to vector<16x128xf32>
    %8 = arith.truncf %7 : vector<16x128xf32> to vector<16x128xbf16>
    %cst_3 = arith.constant dense<0.000000e+00> : vector<16x16xf32>
    %9 = tpu.matmul %4, %6, %cst_3 {dimension_numbers = #tpu.dot_dimension_numbers<[1], [1], [0], [0], [0, 0, 1, 0], [], []>} : vector<16x128xbf16>, vector<16x128xbf16>, vector<16x16xf32> -> vector<16x16xf32>
    %10 = tpu.iota {dimensions = array<i32: 0>} : vector<16x16xi32>
    %11 = tpu.iota {dimensions = array<i32: 1>} : vector<16x16xi32>
    %c3_i32 = arith.constant 3 : i32
    %12 = vector.broadcast %c3_i32 : i32 to vector<16x16xi32>
    %13 = arith.shrsi %10, %12 : vector<16x16xi32>
    %c3_i32_4 = arith.constant 3 : i32
    %14 = vector.broadcast %c3_i32_4 : i32 to vector<16x16xi32>
    %15 = arith.shrsi %11, %14 : vector<16x16xi32>
    %16 = arith.cmpi eq, %13, %15 : vector<16x16xi32>
    %17 = arith.cmpi sle, %11, %10 : vector<16x16xi32>
    %18 = arith.andi %16, %17 : vector<16x16xi1>
    %cst_5 = arith.constant 0xFF800000 : f32
    %19 = vector.broadcast %cst_5 : f32 to vector<16x16xf32>
    %20 = arith.select %18, %9, %19 : vector<16x16xi1>, vector<16x16xf32>
    %cst_6 = arith.constant dense<0xFF800000> : vector<16xf32>
    %21 = vector.multi_reduction <maximumf>, %20, %cst_6 [1] : vector<16x16xf32> to vector<16xf32>
    %22 = vector.shape_cast %21 : vector<16xf32> to vector<16x1xf32>
    %23 = vector.broadcast %22 : vector<16x1xf32> to vector<16x16xf32>
    %24 = arith.subf %20, %23 : vector<16x16xf32>
    %25 = math.exp %24 : vector<16x16xf32>
    %cst_7 = arith.constant dense<0.000000e+00> : vector<16xf32>
    %26 = vector.multi_reduction <add>, %25, %cst_7 [1] : vector<16x16xf32> to vector<16xf32>
    %27 = vector.shape_cast %26 : vector<16xf32> to vector<16x1xf32>
    %28 = tpu.reciprocal %27 {approx = true} : vector<16x1xf32> -> vector<16x1xf32>
    %29 = vector.broadcast %28 : vector<16x1xf32> to vector<16x16xf32>
    %30 = arith.mulf %25, %29 : vector<16x16xf32>
    %31 = arith.truncf %30 : vector<16x16xf32> to vector<16x16xbf16>
    %cst_8 = arith.constant dense<0.000000e+00> : vector<16x128xf32>
    %32 = tpu.matmul %31, %8, %cst_8 {dimension_numbers = #tpu.dot_dimension_numbers<[1], [0], [0], [1], [0, 0, 1, 1], [], []>} : vector<16x16xbf16>, vector<16x128xbf16>, vector<16x128xf32> -> vector<16x128xf32>
    %c0_9 = arith.constant 0 : index
    %c0_10 = arith.constant 0 : index
    %33 = vector.load %arg2[%c0_9, %c0_10] : memref<16x128xf32, #tpu.memory_space<vmem>>, vector<16x128xf32>
    tpu.vector_store %arg2[%c0_9, %c0_10], %32 {strides = array<i32>} : memref<16x128xf32, #tpu.memory_space<vmem>>, vector<16x128xf32>,
    return
  }
}

</mosaic_0001>

<llo_original>
// kernel: head_forward.1
$region0: #{head_forward.1}
  #allocation0 [shape = 'u32[]', space=smem, size = 0x4, offset = 0x4, fixed_abs, tag = 'smem constant byte address 0x4 - core index']
  #allocation1 [shape = 'u32[72,128]{1,0:T(1,128)}', space=vmem, size = 0x9000, scoped, tag = 'internal scratch']
  %s0 = inlined_call_operand.vmem [shape: bf16[16,32], index: 0, kind: input, shape index: {}]
  %s1 = inlined_call_operand.hbm [shape: bf16[32,384], index: 1, kind: input, shape index: {}]
  %s2 = inlined_call_operand.vmem [shape: f32[16,128], index: 2, kind: output, shape index: {}]
  %s3 = sld [smem:[#allocation0]]
  $region22: #{head_forward.1} parent=0
    _
  %s5 = ssub.s32 1, %s3
  %s6 = scalar_select 0, %s5, %s3
  $region1: #{head_forward.1} parent=0
    #allocation2 [shape = 'u8[24576]{0}', space=vmem, size = 0x6000, scoped, tag = 'input window, operand 1, single buffered']
    #allocation3 [shape = 's32[1]{0}', space=sflag, size = 0x4, scoped, tag = 'scoped memory for head_forward.1']
    %7 = vsyncpa [#allocation3], 0
    // Predicated region
    $region2: #{head_forward.1} parent=1 // pred_check
      _
    $region3: #{head_forward.1} parent=1 // pred_check_branch
      %9 = sbr.rel (0) target = $region5
    $region4: #{head_forward.1} parent=1 // pred_region
      _
    $region5: #{head_forward.1} parent=1 // pred_fallthru
      _
    // Predicated region
    $region6: #{head_forward.1} parent=1 // pred_check
      _
    $region7: #{head_forward.1} parent=1 // pred_check_branch
      %11 = sbr.rel (0) target = $region9
    $region8: #{head_forward.1} parent=1 // pred_region
      %13 = vsyncadd [#allocation3], 0
      %s14 = sshll.u32 %s1, 4
      %s15 = int_to_ptr.hbm [resolvable:$true] %s14
      %s16 = sshll.u32 [#allocation2], 4
      %s17 = int_to_ptr.vmem [resolvable:$true] %s16
      %22 = dma.hbm_to_vmem [thread:$0]  %s15, 768, %s17, [#allocation3], 192, 192, 12
    $region9: #{head_forward.1} parent=1 // pred_fallthru
      _
    // Predicated region
    $region10: #{head_forward.1} parent=1 // pred_check
      _
    $region11: #{head_forward.1} parent=1 // pred_check_branch
      %24 = sbr.rel (0) target = $region13
    $region12: #{head_forward.1} parent=1 // pred_region
      %26 = dma.done [#allocation3], 768
    $region13: #{head_forward.1} parent=1 // pred_fallthru
      _
    %v28 = vld [vmem:[%s0] sm:$0xf]
    %v29 = vld [vmem:[%s0 + $0x4] sm:$0xf]
    %v30 = vld [vmem:[#allocation2] sm:$0xff]
    %v31 = vld [vmem:[#allocation2 + $0x8] sm:$0xf]
    %v32 = vld [vmem:[#allocation2 + $0xc] sm:$0xff]
    %v33 = vld [vmem:[#allocation2 + $0x14] sm:$0xf]
    %v34 = vld [vmem:[#allocation2 + $0x18] sm:$0xff]
    %v35 = vld [vmem:[#allocation2 + $0x20] sm:$0xf]
    %v36 = vld [vmem:[#allocation2 + $0x24] sm:$0xff]
    %v37 = vld [vmem:[#allocation2 + $0x2c] sm:$0xf]
    %v40 = vunpack.c.l.b16 %v28
    %v41 = vunpack.c.l.b16 %v29
    %v42 = vpack.c.b16 %v41, %v40
    %v51 = vunpack.c.l.b16 %v30
    %v52 = vunpack.c.h.b16 %v30
    %v53 = vunpack.c.l.b16 %v31
    %v54 = vunpack.c.l.b16 %v32
    %v55 = vunpack.c.h.b16 %v32
    %v56 = vunpack.c.l.b16 %v33
    %v57 = vunpack.c.l.b16 %v34
    %v58 = vunpack.c.h.b16 %v34
    %v59 = vunpack.c.l.b16 %v35
    %v60 = vunpack.c.l.b16 %v36
    %v61 = vunpack.c.h.b16 %v36
    %v62 = vunpack.c.l.b16 %v37
    %v63 = vpack.c.b16 %v54, %v51
    %v64 = vpack.c.b16 %v55, %v52
    %v65 = vpack.c.b16 %v56, %v53
    %v66 = vpack.c.b16 %v60, %v57
    %v67 = vpack.c.b16 %v61, %v58
    %v68 = vpack.c.b16 %v62, %v59
    %vm75 = vcmask 261120
    %v77 = vsel %vm75, %v42, 0
    %79 = vmatpush.bf16.msra.mxu0 0
    %80 = vmatpush.bf16.msra.mxu0 0
    %81 = vmatpush.bf16.msra.mxu0 0
    %82 = vmatpush.bf16.msra.mxu0 0
    %83 = vmatpush.bf16.msra.mxu0 0
    %84 = vmatpush.bf16.msra.mxu0 0
    %85 = vmatpush.bf16.msra.mxu0 %v66
    %86 = vmatpush.bf16.msra.mxu0 %v63
    %87 = vmatmul.bf16.gmra.mxu0 %v77
    %v88 = vpop.f32.mrf.mxu0
    %v89 = vadd.f32 0.0, %v88
    %v90 = vpop.f32.mrf.mxu0
    %v91 = vadd.f32 0.0, %v90
    %92 = vdwg.mxu0
    %93 = vmatpush.bf16.msra.mxu0 0
    %94 = vmatpush.bf16.msra.mxu0 0
    %95 = vmatpush.bf16.msra.mxu0 0
    %96 = vmatpush.bf16.msra.mxu0 0
    %97 = vmatpush.bf16.msra.mxu0 0
    %98 = vmatpush.bf16.msra.mxu0 0
    %99 = vmatpush.bf16.msra.mxu0 %v67
    %100 = vmatpush.bf16.msra.mxu0 %v64
    %101 = vmatmul.bf16.gmra.mxu0 %v77
    %v102 = vpop.f32.mrf.mxu0
    %v103 = vadd.f32 0.0, %v102
    %v104 = vpop.f32.mrf.mxu0
    %v105 = vadd.f32 0.0, %v104
    %106 = vdwg.mxu0
    %107 = vmatpush.bf16.msra.mxu0 0
    %108 = vmatpush.bf16.msra.mxu0 0
    %109 = vmatpush.bf16.msra.mxu0 0
    %110 = vmatpush.bf16.msra.mxu0 0
    %111 = vmatpush.bf16.msra.mxu0 0
    %112 = vmatpush.bf16.msra.mxu0 0
    %113 = vmatpush.bf16.msra.mxu0 %v68
    %114 = vmatpush.bf16.msra.mxu0 %v65
    %115 = vmatmul.bf16.gmra.mxu0 %v77
    %v116 = vpop.f32.mrf.mxu0
    %v117 = vadd.f32 0.0, %v116
    %v118 = vpop.f32.mrf.mxu0
    %v119 = vadd.f32 0.0, %v118
    %120 = vdwg.mxu0
    %v121 = vpack.c.bf16 %v91, %v89
    %v122 = vpack.c.bf16 %v105, %v103
    %v123 = vpack.c.bf16 %v119, %v117
    %124 = vmatpush.bf16.xpose.msra.mxu0 0
    %125 = vmatpush.bf16.xpose.msra.mxu0 0
    %126 = vmatpush.bf16.xpose.msra.mxu0 0
    %127 = vmatpush.bf16.xpose.msra.mxu0 0
    %128 = vmatpush.bf16.xpose.msra.mxu0 0
    %129 = vmatpush.bf16.xpose.msra.mxu0 0
    %130 = vmatpush.bf16.xpose.msra.mxu0 0
    %131 = vmatpush.bf16.xpose.msra.mxu0 %v122
    %132 = vmatmul.bf16.gmra.mxu0 %v121
    %v133 = vpop.f32.mrf.mxu0
    %v134 = vadd.f32 0.0, %v133
    %v135 = vpop.f32.mrf.mxu0
    %v136 = vadd.f32 0.0, %v135
    %137 = vdwg.mxu0
    %v138 = vlaneseq
    %v139 = vshrl.u32 %v138, 7
    %v140 = vadd.s32 %v139, 8
    %v141 = vlaneseq
    %v142 = vand.u32 %v141, 127
    %v143 = vshra.s32 %v139, 3
    %v144 = vshra.s32 %v140, 3
    %v145 = vshra.s32 %v142, 3
    %vm146 = vcmp.eq.s32.totalorder %v143, %v145
    %vm147 = vcmp.eq.s32.totalorder %v144, %v145
    %vm148 = vcmp.le.s32.totalorder %v142, %v139
    %vm149 = vcmp.le.s32.totalorder %v142, %v140
    %vm150 = vmand %vm146, %vm148
    %vm151 = vmand %vm147, %vm149
    %v152 = vsel %vm150, %v134, -inf
    %v153 = vsel %vm151, %v136, -inf
    %vm154 = vcmask 130048
    %v155 = vsel %vm154, %v152, -inf
    %156 = vmax.xlane.f32.xlu0 %v155
    %v157 = vpop.xlane.xlu0 %156
    %v158 = vsel %vm154, %v153, -inf
    %159 = vmax.xlane.f32.xlu0 %v158
    %v160 = vpop.xlane.xlu0 %159
    %v161 = vsub.f32 %v152, %v157
    %v162 = vsub.f32 %v153, %v160
    %v163 = vmul.f32 %v161, 1.442695
    %v164 = vpow.pop %v163
    %v165 = vmul.f32 %v162, 1.442695
    %v166 = vpow.pop %v165
    %v167 = vsel %vm154, %v164, 0.0
    %168 = vadd.xlane.f32.xlu0 %v167
    %v169 = vpop.xlane.xlu0 %168
    %v170 = vsel %vm154, %v166, 0.0
    %171 = vadd.xlane.f32.xlu0 %v170
    %v172 = vpop.xlane.xlu0 %171
    %v173 = vrcp.pop %v169
    %v174 = vrcp.pop %v172
    %v175 = vmul.f32 %v164, %v173
    %v176 = vmul.f32 %v166, %v174
    %v177 = vpack.c.bf16 %v176, %v175
    %v179 = vsel %vm154, %v177, 0
    %181 = vmatpush.bf16.msra.mxu0 0
    %182 = vmatpush.bf16.msra.mxu0 0
    %183 = vmatpush.bf16.msra.mxu0 0
    %184 = vmatpush.bf16.msra.mxu0 0
    %185 = vmatpush.bf16.msra.mxu0 0
    %186 = vmatpush.bf16.msra.mxu0 0
    %187 = vmatpush.bf16.msra.mxu0 0
    %188 = vmatpush.bf16.msra.mxu0 %v123
    %189 = vmatmul.bf16.gmra.mxu0 %v179
    %v190 = vpop.f32.mrf.mxu0
    %v191 = vadd.f32 0.0, %v190
    %v192 = vpop.f32.mrf.mxu0
    %v193 = vadd.f32 0.0, %v192
    %194 = vdwg.mxu0
    %195 = vst [vmem:[%s2] sm:$0xff] %v191
    %196 = vst [vmem:[%s2 + $0x8] sm:$0xff] %v193
    // Predicated region
    $region14: #{head_forward.1} parent=1 // pred_check
      _
    $region15: #{head_forward.1} parent=1 // pred_check_branch
      %198 = sbr.rel (0) target = $region17
    $region16: #{head_forward.1} parent=1 // pred_region
      _
    $region17: #{head_forward.1} parent=1 // pred_fallthru
      _
    // Predicated region
    $region18: #{head_forward.1} parent=1 // pred_check
      _
    $region19: #{head_forward.1} parent=1 // pred_check_branch
      %200 = sbr.rel (0) target = $region21
    $region20: #{head_forward.1} parent=1 // pred_region
      _
    $region21: #{head_forward.1} parent=1 // pred_fallthru
      _
    %201 = vsyncpa [#allocation3], 1

</llo_original>
